<compile_context>
chip_gen: v7x
topology: tpu7x:2x2x1
jax: 0.10.0
libtpu: 0.0.40
codegen_flags: <defaults>
</compile_context>

<pallas_src>
import jax
import jax.numpy as jnp
from jax.experimental import pallas as pl
from jax.experimental.pallas import tpu as pltpu  # noqa: F401  (not needed for this single-program kernel)

B, HQ, HKV, S, D = 2, 4, 2, 32, 64
GROUP = HQ // HKV            # GQA repeat factor = 2
RQ = B * HQ * S              # 256 merged query rows
RK = B * HKV * S             # 128 merged key/value rows
INV_SCALE = 0.125            # graph divides scores by 8.0 (= sqrt(64))
NEG_INF = float("-inf")


def _attn_kernel(q_ref, k_ref, v_ref, o_ref):
    # q_ref: (256, 64); k_ref/v_ref: (128, 64); o_ref: (256, 64)
    q = q_ref[...]
    k = k_ref[...]
    v = v_ref[...]

    # scores = Q @ K^T, contracting on D directly (no explicit K transpose).
    s = jax.lax.dot_general(
        q, k, (((1,), (1,)), ((), ())),
        preferred_element_type=jnp.float32)                      # (256, 128)

    # Static additive bias: valid iff query row and key col belong to the same
    # (batch, kv-head) block AND key position <= query position (causal).
    #   query row r: (batch*2 + hq//GROUP) == r >> 6, position i == r & 31
    #   key   col c: (batch*2 + kv_head)   == c >> 5, position j == c & 31
    r = jax.lax.broadcasted_iota(jnp.int32, (RQ, RK), 0)
    c = jax.lax.broadcasted_iota(jnp.int32, (RQ, RK), 1)
    same_block = (r >> 6) == (c >> 5)
    causal = (c & (S - 1)) <= (r & (S - 1))
    bias = jnp.where(same_block & causal, 0.0, NEG_INF).astype(jnp.float32)

    s = s * INV_SCALE + bias

    # Softmax (max-subtract, exp, weighted sum, normalize), same op order as
    # the FX graph.  Each row keeps its own diagonal entry, so the max is
    # always finite and exp(-inf - m) == 0 exactly for masked entries.
    m = jnp.max(s, axis=-1, keepdims=True)
    p = jnp.exp(s - m)
    num = jnp.dot(p, v, preferred_element_type=jnp.float32)      # (256, 64)
    den = jnp.sum(p, axis=-1, keepdims=True)                     # (256, 1)

    # EUP approximate reciprocal + one Newton-Raphson refinement (exactness
    # restored to ~f32 precision; avoids the exact VALU divide sequence).
    r_inv = pl.reciprocal(den, approx=True)
    r_inv = r_inv * (2.0 - den * r_inv)

    o_ref[...] = (num * r_inv).astype(o_ref.dtype)


def repro_forward(q, k, v):
    """q: [B, HQ, S, D]; k, v: [B, HKV, S, D]  ->  [B, HQ, S, D] float32."""
    q2 = q.reshape(RQ, D)      # contiguous, free reshapes
    k2 = k.reshape(RK, D)
    v2 = v.reshape(RK, D)
    out2 = pl.pallas_call(
        _attn_kernel,
        out_shape=jax.ShapeDtypeStruct((RQ, D), jnp.float32),
        grid=(1,),  # single fat program: per-step overhead >> DMA/compute here
        in_specs=[
            pl.BlockSpec((RQ, D), lambda i: (0, 0)),   # Q
            pl.BlockSpec((RK, D), lambda i: (0, 0)),   # K
            pl.BlockSpec((RK, D), lambda i: (0, 0)),   # V
        ],
        out_specs=pl.BlockSpec((RQ, D), lambda i: (0, 0)),
    )(q2, k2, v2)
    return out2.reshape(B, HQ, S, D)


def _reference(q, k, v):
    # pure-JAX mirror of the FX graph for validation
    k_e = jnp.repeat(k, GROUP, axis=1)      # [B, HQ, S, D]
    v_e = jnp.repeat(v, GROUP, axis=1)
    s = jnp.einsum("bhsd,bhtd->bhst", q, k_e) / 8.0
    row = jnp.arange(S)[:, None]
    col = jnp.arange(S)[None, :]
    s = jnp.where((col - row) >= 1, -jnp.inf, s)
    m = jnp.max(s, axis=-1, keepdims=True)
    p = jnp.exp(s - m)
    return jnp.einsum("bhst,bhtd->bhsd", p, v_e) / jnp.sum(p, axis=-1, keepdims=True)


if __name__ == "__main__":
    key = jax.random.PRNGKey(0)
    kq, kk, kv = jax.random.split(key, 3)
    q = jax.random.normal(kq, (B, HQ, S, D), dtype=jnp.float32)    # arg0_1
    k = jax.random.normal(kk, (B, HKV, S, D), dtype=jnp.float32)   # arg1_1
    v = jax.random.normal(kv, (B, HKV, S, D), dtype=jnp.float32)   # arg2_1

    out = repro_forward(q, k, v)
    out = jax.block_until_ready(out)

    ref = jax.block_until_ready(_reference(q, k, v))
    assert out.shape == (B, HQ, S, D) and out.dtype == jnp.float32
    assert jnp.allclose(out, ref, atol=1e-5, rtol=1e-5), "mismatch vs reference"

    print("KERNEL_OK")
</pallas_src>

<mosaic_0001>
module attributes {stable_mosaic.version = 11 : i64} {
  func.func @_attn_kernel(%arg0: i32, %arg1: memref<256x64xf32, #tpu.memory_space<vmem>>, %arg2: memref<128x64xf32, #tpu.memory_space<vmem>>, %arg3: memref<128x64xf32, #tpu.memory_space<vmem>>, %arg4: memref<256x64xf32, #tpu.memory_space<vmem>>) attributes {dimension_semantics = [#tpu.dimension_semantics<arbitrary>], iteration_bounds = array<i64: 1>, scalar_prefetch = 0 : i64, scratch_operands = 0 : i64, tpu.core_type = #tpu.core_type<tc>, window_params = [{pipeline_mode = #tpu.pipeline_mode<synchronous>, transform_indices = @transform_0, window_bounds = array<i64: 256, 64>}, {pipeline_mode = #tpu.pipeline_mode<synchronous>, transform_indices = @transform_1, window_bounds = array<i64: 128, 64>}, {pipeline_mode = #tpu.pipeline_mode<synchronous>, transform_indices = @transform_2, window_bounds = array<i64: 128, 64>}, {pipeline_mode = #tpu.pipeline_mode<synchronous>, transform_indices = @transform_3, window_bounds = array<i64: 256, 64>}]} {
    %c0 = arith.constant 0 : index
    %c0_0 = arith.constant 0 : index
    %0 = vector.load %arg1[%c0, %c0_0] : memref<256x64xf32, #tpu.memory_space<vmem>>, vector<256x64xf32>
    %c0_1 = arith.constant 0 : index
    %c0_2 = arith.constant 0 : index
    %1 = vector.load %arg2[%c0_1, %c0_2] : memref<128x64xf32, #tpu.memory_space<vmem>>, vector<128x64xf32>
    %c0_3 = arith.constant 0 : index
    %c0_4 = arith.constant 0 : index
    %2 = vector.load %arg3[%c0_3, %c0_4] : memref<128x64xf32, #tpu.memory_space<vmem>>, vector<128x64xf32>
    %cst = arith.constant dense<0.000000e+00> : vector<256x128xf32>
    %3 = tpu.matmul %0, %1, %cst {dimension_numbers = #tpu.dot_dimension_numbers<[1], [1], [0], [0], [0, 0, 1, 0], [], []>} : vector<256x64xf32>, vector<128x64xf32>, vector<256x128xf32> -> vector<256x128xf32>
    %4 = tpu.iota {dimensions = array<i32: 0>} : vector<256x128xi32>
    %5 = tpu.iota {dimensions = array<i32: 1>} : vector<256x128xi32>
    %c6_i32 = arith.constant 6 : i32
    %6 = vector.broadcast %c6_i32 : i32 to vector<256x128xi32>
    %7 = arith.shrsi %4, %6 : vector<256x128xi32>
    %c5_i32 = arith.constant 5 : i32
    %8 = vector.broadcast %c5_i32 : i32 to vector<256x128xi32>
    %9 = arith.shrsi %5, %8 : vector<256x128xi32>
    %10 = arith.cmpi eq, %7, %9 : vector<256x128xi32>
    %c31_i32 = arith.constant 31 : i32
    %11 = vector.broadcast %c31_i32 : i32 to vector<256x128xi32>
    %12 = arith.andi %5, %11 : vector<256x128xi32>
    %c31_i32_5 = arith.constant 31 : i32
    %13 = vector.broadcast %c31_i32_5 : i32 to vector<256x128xi32>
    %14 = arith.andi %4, %13 : vector<256x128xi32>
    %15 = arith.cmpi sle, %12, %14 : vector<256x128xi32>
    %16 = arith.andi %10, %15 : vector<256x128xi1>
    %cst_6 = arith.constant 0.000000e+00 : f32
    %cst_7 = arith.constant 0xFF800000 : f32
    %17 = vector.broadcast %cst_6 : f32 to vector<256x128xf32>
    %18 = vector.broadcast %cst_7 : f32 to vector<256x128xf32>
    %19 = arith.select %16, %17, %18 : vector<256x128xi1>, vector<256x128xf32>
    %cst_8 = arith.constant 1.250000e-01 : f32
    %20 = vector.broadcast %cst_8 : f32 to vector<256x128xf32>
    %21 = arith.mulf %3, %20 : vector<256x128xf32>
    %22 = arith.addf %21, %19 : vector<256x128xf32>
    %cst_9 = arith.constant dense<0xFF800000> : vector<256xf32>
    %23 = vector.multi_reduction <maximumf>, %22, %cst_9 [1] : vector<256x128xf32> to vector<256xf32>
    %24 = vector.shape_cast %23 : vector<256xf32> to vector<256x1xf32>
    %25 = vector.broadcast %24 : vector<256x1xf32> to vector<256x128xf32>
    %26 = arith.subf %22, %25 : vector<256x128xf32>
    %27 = math.exp %26 : vector<256x128xf32>
    %cst_10 = arith.constant dense<0.000000e+00> : vector<256x64xf32>
    %28 = tpu.matmul %27, %2, %cst_10 {dimension_numbers = #tpu.dot_dimension_numbers<[1], [0], [0], [1], [0, 0, 1, 1], [], []>} : vector<256x128xf32>, vector<128x64xf32>, vector<256x64xf32> -> vector<256x64xf32>
    %cst_11 = arith.constant dense<0.000000e+00> : vector<256xf32>
    %29 = vector.multi_reduction <add>, %27, %cst_11 [1] : vector<256x128xf32> to vector<256xf32>
    %30 = vector.shape_cast %29 : vector<256xf32> to vector<256x1xf32>
    %31 = tpu.reciprocal %30 {approx = true} : vector<256x1xf32> -> vector<256x1xf32>
    %32 = arith.mulf %30, %31 : vector<256x1xf32>
    %cst_12 = arith.constant 2.000000e+00 : f32
    %33 = vector.broadcast %cst_12 : f32 to vector<256x1xf32>
    %34 = arith.subf %33, %32 : vector<256x1xf32>
    %35 = arith.mulf %31, %34 : vector<256x1xf32>
    %36 = vector.broadcast %35 : vector<256x1xf32> to vector<256x64xf32>
    %37 = arith.mulf %28, %36 : vector<256x64xf32>
    %c0_13 = arith.constant 0 : index
    %c0_14 = arith.constant 0 : index
    %38 = vector.load %arg4[%c0_13, %c0_14] : memref<256x64xf32, #tpu.memory_space<vmem>>, vector<256x64xf32>
    tpu.vector_store %arg4[%c0_13, %c0_14], %37 {strides = array<i32>} : memref<256x64xf32, #tpu.memory_space<vmem>>, vector<256x64xf32>,
    return
  }
  func.func @transform_0(%arg0: i32) -> (i32, i32) {
    %c0_i32 = arith.constant 0 : i32
    %c0_i32_0 = arith.constant 0 : i32
    %c0_i32_1 = arith.constant 0 : i32
    return %c0_i32, %c0_i32_0 : i32, i32
  }
  func.func @transform_1(%arg0: i32) -> (i32, i32) {
    %c0_i32 = arith.constant 0 : i32
    %c0_i32_0 = arith.constant 0 : i32
    %c0_i32_1 = arith.constant 0 : i32
    return %c0_i32, %c0_i32_0 : i32, i32
  }
  func.func @transform_2(%arg0: i32) -> (i32, i32) {
    %c0_i32 = arith.constant 0 : i32
    %c0_i32_0 = arith.constant 0 : i32
    %c0_i32_1 = arith.constant 0 : i32
    return %c0_i32, %c0_i32_0 : i32, i32
  }
  func.func @transform_3(%arg0: i32) -> (i32, i32) {
    %c0_i32 = arith.constant 0 : i32
    %c0_i32_0 = arith.constant 0 : i32
    %c0_i32_1 = arith.constant 0 : i32
    return %c0_i32, %c0_i32_0 : i32, i32
  }
}

</mosaic_0001>

<llo_original>
// kernel: tpu_custom_call.1
$region0: #{tpu_custom_call.1}
  #allocation0 [shape = 'u32[]', space=smem, size = 0x4, offset = 0x4, fixed_abs, tag = 'smem constant byte address 0x4 - core index']
  #allocation1 [shape = 'u32[144,128]{1,0:T(1,128)}', space=vmem, size = 0x12000, scoped, tag = 'internal scratch']
  %s0 = inlined_call_operand.vmem [shape: f32[256,64], index: 0, kind: input, shape index: {}]
  %s1 = inlined_call_operand.vmem [shape: f32[128,64], index: 1, kind: input, shape index: {}]
  %s2 = inlined_call_operand.vmem [shape: f32[128,64], index: 2, kind: input, shape index: {}]
  %s3 = inlined_call_operand.vmem [shape: f32[256,64], index: 3, kind: output, shape index: {}]
  %s4 = sld [smem:[#allocation0]]
  $region22: #{tpu_custom_call.1} parent=0
    _
  %s6 = ssub.s32 1, %s4
  %s7 = scalar_select 0, %s6, %s4
  // Predicated region
  $region2: #{tpu_custom_call.1} parent=0 // pred_check
    _
  $region3: #{tpu_custom_call.1} parent=0 // pred_check_branch
    %9 = sbr.rel (0) target = $region5
  $region4: #{tpu_custom_call.1} parent=0 // pred_region
    _
  $region5: #{tpu_custom_call.1} parent=0 // pred_fallthru
    _
  // Predicated region
  $region6: #{tpu_custom_call.1} parent=0 // pred_check
    _
  $region7: #{tpu_custom_call.1} parent=0 // pred_check_branch
    %11 = sbr.rel (0) target = $region9
  $region8: #{tpu_custom_call.1} parent=0 // pred_region
    _
  $region9: #{tpu_custom_call.1} parent=0 // pred_fallthru
    _
  // Predicated region
  $region10: #{tpu_custom_call.1} parent=0 // pred_check
    _
  $region11: #{tpu_custom_call.1} parent=0 // pred_check_branch
    %13 = sbr.rel (0) target = $region13
  $region12: #{tpu_custom_call.1} parent=0 // pred_region
    _
  $region13: #{tpu_custom_call.1} parent=0 // pred_fallthru
    _
  %v14 = vld [vmem:[%s0] sm:$0xff]
  %v15 = vld [vmem:[%s0 + $0x8] sm:$0xff]
  %v16 = vld [vmem:[%s0 + $0x10] sm:$0xff]
  %v17 = vld [vmem:[%s0 + $0x18] sm:$0xff]
  %v18 = vld [vmem:[%s0 + $0x20] sm:$0xff]
  %v19 = vld [vmem:[%s0 + $0x28] sm:$0xff]
  %v20 = vld [vmem:[%s0 + $0x30] sm:$0xff]
  %v21 = vld [vmem:[%s0 + $0x38] sm:$0xff]
  %v22 = vld [vmem:[%s0 + $0x40] sm:$0xff]
  %v23 = vld [vmem:[%s0 + $0x48] sm:$0xff]
  %v24 = vld [vmem:[%s0 + $0x50] sm:$0xff]
  %v25 = vld [vmem:[%s0 + $0x58] sm:$0xff]
  %v26 = vld [vmem:[%s0 + $0x60] sm:$0xff]
  %v27 = vld [vmem:[%s0 + $0x68] sm:$0xff]
  %v28 = vld [vmem:[%s0 + $0x70] sm:$0xff]
  %v29 = vld [vmem:[%s0 + $0x78] sm:$0xff]
  %v30 = vld [vmem:[%s0 + $0x80] sm:$0xff]
  %v31 = vld [vmem:[%s0 + $0x88] sm:$0xff]
  %v32 = vld [vmem:[%s0 + $0x90] sm:$0xff]
  %v33 = vld [vmem:[%s0 + $0x98] sm:$0xff]
  %v34 = vld [vmem:[%s0 + $0xa0] sm:$0xff]
  %v35 = vld [vmem:[%s0 + $0xa8] sm:$0xff]
  %v36 = vld [vmem:[%s0 + $0xb0] sm:$0xff]
  %v37 = vld [vmem:[%s0 + $0xb8] sm:$0xff]
  %v38 = vld [vmem:[%s0 + $0xc0] sm:$0xff]
  %v39 = vld [vmem:[%s0 + $0xc8] sm:$0xff]
  %v40 = vld [vmem:[%s0 + $0xd0] sm:$0xff]
  %v41 = vld [vmem:[%s0 + $0xd8] sm:$0xff]
  %v42 = vld [vmem:[%s0 + $0xe0] sm:$0xff]
  %v43 = vld [vmem:[%s0 + $0xe8] sm:$0xff]
  %v44 = vld [vmem:[%s0 + $0xf0] sm:$0xff]
  %v45 = vld [vmem:[%s0 + $0xf8] sm:$0xff]
  %v46 = vld [vmem:[%s1] sm:$0xff]
  %v47 = vld [vmem:[%s1 + $0x8] sm:$0xff]
  %v48 = vld [vmem:[%s1 + $0x10] sm:$0xff]
  %v49 = vld [vmem:[%s1 + $0x18] sm:$0xff]
  %v50 = vld [vmem:[%s1 + $0x20] sm:$0xff]
  %v51 = vld [vmem:[%s1 + $0x28] sm:$0xff]
  %v52 = vld [vmem:[%s1 + $0x30] sm:$0xff]
  %v53 = vld [vmem:[%s1 + $0x38] sm:$0xff]
  %v54 = vld [vmem:[%s1 + $0x40] sm:$0xff]
  %v55 = vld [vmem:[%s1 + $0x48] sm:$0xff]
  %v56 = vld [vmem:[%s1 + $0x50] sm:$0xff]
  %v57 = vld [vmem:[%s1 + $0x58] sm:$0xff]
  %v58 = vld [vmem:[%s1 + $0x60] sm:$0xff]
  %v59 = vld [vmem:[%s1 + $0x68] sm:$0xff]
  %v60 = vld [vmem:[%s1 + $0x70] sm:$0xff]
  %v61 = vld [vmem:[%s1 + $0x78] sm:$0xff]
  %v62 = vld [vmem:[%s2] sm:$0xff]
  %v63 = vld [vmem:[%s2 + $0x8] sm:$0xff]
  %v64 = vld [vmem:[%s2 + $0x10] sm:$0xff]
  %v65 = vld [vmem:[%s2 + $0x18] sm:$0xff]
  %v66 = vld [vmem:[%s2 + $0x20] sm:$0xff]
  %v67 = vld [vmem:[%s2 + $0x28] sm:$0xff]
  %v68 = vld [vmem:[%s2 + $0x30] sm:$0xff]
  %v69 = vld [vmem:[%s2 + $0x38] sm:$0xff]
  %v70 = vld [vmem:[%s2 + $0x40] sm:$0xff]
  %v71 = vld [vmem:[%s2 + $0x48] sm:$0xff]
  %v72 = vld [vmem:[%s2 + $0x50] sm:$0xff]
  %v73 = vld [vmem:[%s2 + $0x58] sm:$0xff]
  %v74 = vld [vmem:[%s2 + $0x60] sm:$0xff]
  %v75 = vld [vmem:[%s2 + $0x68] sm:$0xff]
  %v76 = vld [vmem:[%s2 + $0x70] sm:$0xff]
  %v77 = vld [vmem:[%s2 + $0x78] sm:$0xff]
  %vm78 = vcmask 523264
  %v80 = vsel %vm78, %v14, 0
  %v83 = vsel %vm78, %v15, 0
  %v86 = vsel %vm78, %v16, 0
  %v89 = vsel %vm78, %v17, 0
  %v92 = vsel %vm78, %v18, 0
  %v95 = vsel %vm78, %v19, 0
  %v98 = vsel %vm78, %v20, 0
  %v101 = vsel %vm78, %v21, 0
  %v104 = vsel %vm78, %v22, 0
  %v107 = vsel %vm78, %v23, 0
  %v110 = vsel %vm78, %v24, 0
  %v113 = vsel %vm78, %v25, 0
  %v116 = vsel %vm78, %v26, 0
  %v119 = vsel %vm78, %v27, 0
  %v122 = vsel %vm78, %v28, 0
  %v125 = vsel %vm78, %v29, 0
  %v128 = vsel %vm78, %v30, 0
  %v131 = vsel %vm78, %v31, 0
  %v134 = vsel %vm78, %v32, 0
  %v137 = vsel %vm78, %v33, 0
  %v140 = vsel %vm78, %v34, 0
  %v143 = vsel %vm78, %v35, 0
  %v146 = vsel %vm78, %v36, 0
  %v149 = vsel %vm78, %v37, 0
  %v152 = vsel %vm78, %v38, 0
  %v155 = vsel %vm78, %v39, 0
  %v158 = vsel %vm78, %v40, 0
  %v161 = vsel %vm78, %v41, 0
  %v164 = vsel %vm78, %v42, 0
  %v167 = vsel %vm78, %v43, 0
  %v170 = vsel %vm78, %v44, 0
  %v173 = vsel %vm78, %v45, 0
  %v176 = vsel %vm78, %v46, 0
  %v179 = vsel %vm78, %v47, 0
  %v182 = vsel %vm78, %v48, 0
  %v185 = vsel %vm78, %v49, 0
  %v188 = vsel %vm78, %v50, 0
  %v191 = vsel %vm78, %v51, 0
  %v194 = vsel %vm78, %v52, 0
  %v197 = vsel %vm78, %v53, 0
  %v200 = vsel %vm78, %v54, 0
  %v203 = vsel %vm78, %v55, 0
  %v206 = vsel %vm78, %v56, 0
  %v209 = vsel %vm78, %v57, 0
  %v212 = vsel %vm78, %v58, 0
  %v215 = vsel %vm78, %v59, 0
  %v218 = vsel %vm78, %v60, 0
  %v221 = vsel %vm78, %v61, 0
  %223 = vmatprep.subr.mxu0 0.0
  %224 = vmatpush1.xpose.msra.mxu0 %v176
  %225 = vmatprep.subr.mxu0 0.0
  %226 = vmatpush1.xpose.msra.mxu0 %v179
  %227 = vmatprep.subr.mxu0 0.0
  %228 = vmatpush1.xpose.msra.mxu0 %v182
  %229 = vmatprep.subr.mxu0 0.0
  %230 = vmatpush1.xpose.msra.mxu0 %v185
  %231 = vmatprep.subr.mxu0 0.0
  %232 = vmatpush1.xpose.msra.mxu0 %v188
  %233 = vmatprep.subr.mxu0 0.0
  %234 = vmatpush1.xpose.msra.mxu0 %v191
  %235 = vmatprep.subr.mxu0 0.0
  %236 = vmatpush1.xpose.msra.mxu0 %v194
  %237 = vmatprep.subr.mxu0 0.0
  %238 = vmatpush1.xpose.msra.mxu0 %v197
  %239 = vmatprep.subr.mxu0 0.0
  %240 = vmatpush1.xpose.msra.mxu0 %v200
  %241 = vmatprep.subr.mxu0 0.0
  %242 = vmatpush1.xpose.msra.mxu0 %v203
  %243 = vmatprep.subr.mxu0 0.0
  %244 = vmatpush1.xpose.msra.mxu0 %v206
  %245 = vmatprep.subr.mxu0 0.0
  %246 = vmatpush1.xpose.msra.mxu0 %v209
  %247 = vmatprep.subr.mxu0 0.0
  %248 = vmatpush1.xpose.msra.mxu0 %v212
  %249 = vmatprep.subr.mxu0 0.0
  %250 = vmatpush1.xpose.msra.mxu0 %v215
  %251 = vmatprep.subr.mxu0 0.0
  %252 = vmatpush1.xpose.msra.mxu0 %v218
  %253 = vmatprep.subr.mxu0 0.0
  %254 = vmatpush1.xpose.msra.mxu0 %v221
  %255 = vmatprep.subr.mxu0 0.0
  %256 = vmatpush1.xpose.msra.mxu0 0.0
  %257 = vmatprep.subr.mxu0 0.0
  %258 = vmatpush1.xpose.msra.mxu0 0.0
  %259 = vmatprep.subr.mxu0 0.0
  %260 = vmatpush1.xpose.msra.mxu0 0.0
  %261 = vmatprep.subr.mxu0 0.0
  %262 = vmatpush1.xpose.msra.mxu0 0.0
  %263 = vmatprep.subr.mxu0 0.0
  %264 = vmatpush1.xpose.msra.mxu0 0.0
  %265 = vmatprep.subr.mxu0 0.0
  %266 = vmatpush1.xpose.msra.mxu0 0.0
  %267 = vmatprep.subr.mxu0 0.0
  %268 = vmatpush1.xpose.msra.mxu0 0.0
  %269 = vmatprep.subr.mxu0 0.0
  %270 = vmatpush1.xpose.msra.mxu0 0.0
  %271 = vmatprep.subr.mxu0 0.0
  %272 = vmatpush1.xpose.msra.mxu0 0.0
  %273 = vmatprep.subr.mxu0 0.0
  %274 = vmatpush1.xpose.msra.mxu0 0.0
  %275 = vmatprep.subr.mxu0 0.0
  %276 = vmatpush1.xpose.msra.mxu0 0.0
  %277 = vmatprep.subr.mxu0 0.0
  %278 = vmatpush1.xpose.msra.mxu0 0.0
  %279 = vmatprep.subr.mxu0 0.0
  %280 = vmatpush1.xpose.msra.mxu0 0.0
  %281 = vmatprep.subr.mxu0 0.0
  %282 = vmatpush1.xpose.msra.mxu0 0.0
  %283 = vmatprep.subr.mxu0 0.0
  %284 = vmatpush1.xpose.msra.mxu0 0.0
  %285 = vmatprep.subr.mxu0 0.0
  %286 = vmatpush1.xpose.msra.mxu0 0.0
  %287 = vmatprep.mubr.f32.mxu0 0.0
  %288 = vmatmul.mubr.f32.gmra.mrb[0].mxu0 %v80
  %v289 = vpop.f32.mrb[0].mxu0
  %v290 = vadd.f32 0.0, %v289
  %v291 = vpop.f32.mrb[0].mxu0
  %292 = vmatprep.mubr.f32.mxu0 0.0
  %293 = vmatmul.mubr.f32.gmra.mrb[0].mxu0 %v83
  %v294 = vpop.f32.mrb[0].mxu0
  %v295 = vadd.f32 0.0, %v294
  %v296 = vpop.f32.mrb[0].mxu0
  %297 = vmatprep.mubr.f32.mxu0 0.0
  %298 = vmatmul.mubr.f32.gmra.mrb[0].mxu0 %v86
  %v299 = vpop.f32.mrb[0].mxu0
  %v300 = vadd.f32 0.0, %v299
  %v301 = vpop.f32.mrb[0].mxu0
  %302 = vmatprep.mubr.f32.mxu0 0.0
  %303 = vmatmul.mubr.f32.gmra.mrb[0].mxu0 %v89
  %v304 = vpop.f32.mrb[0].mxu0
  %v305 = vadd.f32 0.0, %v304
  %v306 = vpop.f32.mrb[0].mxu0
  %307 = vmatprep.mubr.f32.mxu0 0.0
  %308 = vmatmul.mubr.f32.gmra.mrb[0].mxu0 %v92
  %v309 = vpop.f32.mrb[0].mxu0
  %v310 = vadd.f32 0.0, %v309
  %v311 = vpop.f32.mrb[0].mxu0
  %312 = vmatprep.mubr.f32.mxu0 0.0
  %313 = vmatmul.mubr.f32.gmra.mrb[0].mxu0 %v95
  %v314 = vpop.f32.mrb[0].mxu0
  %v315 = vadd.f32 0.0, %v314
  %v316 = vpop.f32.mrb[0].mxu0
  %317 = vmatprep.mubr.f32.mxu0 0.0
  %318 = vmatmul.mubr.f32.gmra.mrb[0].mxu0 %v98
  %v319 = vpop.f32.mrb[0].mxu0
  %v320 = vadd.f32 0.0, %v319
  %v321 = vpop.f32.mrb[0].mxu0
  %322 = vmatprep.mubr.f32.mxu0 0.0
  %323 = vmatmul.mubr.f32.gmra.mrb[0].mxu0 %v101
  %v324 = vpop.f32.mrb[0].mxu0
  %v325 = vadd.f32 0.0, %v324
  %v326 = vpop.f32.mrb[0].mxu0
  %327 = vmatprep.mubr.f32.mxu0 0.0
  %328 = vmatmul.mubr.f32.gmra.mrb[0].mxu0 %v104
  %v329 = vpop.f32.mrb[0].mxu0
  %v330 = vadd.f32 0.0, %v329
  %v331 = vpop.f32.mrb[0].mxu0
  %332 = vmatprep.mubr.f32.mxu0 0.0
  %333 = vmatmul.mubr.f32.gmra.mrb[0].mxu0 %v107
  %v334 = vpop.f32.mrb[0].mxu0
  %v335 = vadd.f32 0.0, %v334
  %v336 = vpop.f32.mrb[0].mxu0
  %337 = vmatprep.mubr.f32.mxu0 0.0
  %338 = vmatmul.mubr.f32.gmra.mrb[0].mxu0 %v110
  %v339 = vpop.f32.mrb[0].mxu0
  %v340 = vadd.f32 0.0, %v339
  %v341 = vpop.f32.mrb[0].mxu0
  %342 = vmatprep.mubr.f32.mxu0 0.0
  %343 = vmatmul.mubr.f32.gmra.mrb[0].mxu0 %v113
  %v344 = vpop.f32.mrb[0].mxu0
  %v345 = vadd.f32 0.0, %v344
  %v346 = vpop.f32.mrb[0].mxu0
  %347 = vmatprep.mubr.f32.mxu0 0.0
  %348 = vmatmul.mubr.f32.gmra.mrb[0].mxu0 %v116
  %v349 = vpop.f32.mrb[0].mxu0
  %v350 = vadd.f32 0.0, %v349
  %v351 = vpop.f32.mrb[0].mxu0
  %352 = vmatprep.mubr.f32.mxu0 0.0
  %353 = vmatmul.mubr.f32.gmra.mrb[0].mxu0 %v119
  %v354 = vpop.f32.mrb[0].mxu0
  %v355 = vadd.f32 0.0, %v354
  %v356 = vpop.f32.mrb[0].mxu0
  %357 = vmatprep.mubr.f32.mxu0 0.0
  %358 = vmatmul.mubr.f32.gmra.mrb[0].mxu0 %v122
  %v359 = vpop.f32.mrb[0].mxu0
  %v360 = vadd.f32 0.0, %v359
  %v361 = vpop.f32.mrb[0].mxu0
  %362 = vmatprep.mubr.f32.mxu0 0.0
  %363 = vmatmul.mubr.f32.gmra.mrb[0].mxu0 %v125
  %v364 = vpop.f32.mrb[0].mxu0
  %v365 = vadd.f32 0.0, %v364
  %v366 = vpop.f32.mrb[0].mxu0
  %367 = vmatprep.mubr.f32.mxu0 0.0
  %368 = vmatmul.mubr.f32.gmra.mrb[0].mxu0 %v128
  %v369 = vpop.f32.mrb[0].mxu0
  %v370 = vadd.f32 0.0, %v369
  %v371 = vpop.f32.mrb[0].mxu0
  %372 = vmatprep.mubr.f32.mxu0 0.0
  %373 = vmatmul.mubr.f32.gmra.mrb[0].mxu0 %v131
  %v374 = vpop.f32.mrb[0].mxu0
  %v375 = vadd.f32 0.0, %v374
  %v376 = vpop.f32.mrb[0].mxu0
  %377 = vmatprep.mubr.f32.mxu0 0.0
  %378 = vmatmul.mubr.f32.gmra.mrb[0].mxu0 %v134
  %v379 = vpop.f32.mrb[0].mxu0
  %v380 = vadd.f32 0.0, %v379
  %v381 = vpop.f32.mrb[0].mxu0
  %382 = vmatprep.mubr.f32.mxu0 0.0
  %383 = vmatmul.mubr.f32.gmra.mrb[0].mxu0 %v137
  %v384 = vpop.f32.mrb[0].mxu0
  %v385 = vadd.f32 0.0, %v384
  %v386 = vpop.f32.mrb[0].mxu0
  %387 = vmatprep.mubr.f32.mxu0 0.0
  %388 = vmatmul.mubr.f32.gmra.mrb[0].mxu0 %v140
  %v389 = vpop.f32.mrb[0].mxu0
  %v390 = vadd.f32 0.0, %v389
  %v391 = vpop.f32.mrb[0].mxu0
  %392 = vmatprep.mubr.f32.mxu0 0.0
  %393 = vmatmul.mubr.f32.gmra.mrb[0].mxu0 %v143
  %v394 = vpop.f32.mrb[0].mxu0
  %v395 = vadd.f32 0.0, %v394
  %v396 = vpop.f32.mrb[0].mxu0
  %397 = vmatprep.mubr.f32.mxu0 0.0
  %398 = vmatmul.mubr.f32.gmra.mrb[0].mxu0 %v146
  %v399 = vpop.f32.mrb[0].mxu0
  %v400 = vadd.f32 0.0, %v399
  %v401 = vpop.f32.mrb[0].mxu0
  %402 = vmatprep.mubr.f32.mxu0 0.0
  %403 = vmatmul.mubr.f32.gmra.mrb[0].mxu0 %v149
  %v404 = vpop.f32.mrb[0].mxu0
  %v405 = vadd.f32 0.0, %v404
  %v406 = vpop.f32.mrb[0].mxu0
  %407 = vmatprep.mubr.f32.mxu0 0.0
  %408 = vmatmul.mubr.f32.gmra.mrb[0].mxu0 %v152
  %v409 = vpop.f32.mrb[0].mxu0
  %v410 = vadd.f32 0.0, %v409
  %v411 = vpop.f32.mrb[0].mxu0
  %412 = vmatprep.mubr.f32.mxu0 0.0
  %413 = vmatmul.mubr.f32.gmra.mrb[0].mxu0 %v155
  %v414 = vpop.f32.mrb[0].mxu0
  %v415 = vadd.f32 0.0, %v414
  %v416 = vpop.f32.mrb[0].mxu0
  %417 = vmatprep.mubr.f32.mxu0 0.0
  %418 = vmatmul.mubr.f32.gmra.mrb[0].mxu0 %v158
  %v419 = vpop.f32.mrb[0].mxu0
  %v420 = vadd.f32 0.0, %v419
  %v421 = vpop.f32.mrb[0].mxu0
  %422 = vmatprep.mubr.f32.mxu0 0.0
  %423 = vmatmul.mubr.f32.gmra.mrb[0].mxu0 %v161
  %v424 = vpop.f32.mrb[0].mxu0
  %v425 = vadd.f32 0.0, %v424
  %v426 = vpop.f32.mrb[0].mxu0
  %427 = vmatprep.mubr.f32.mxu0 0.0
  %428 = vmatmul.mubr.f32.gmra.mrb[0].mxu0 %v164
  %v429 = vpop.f32.mrb[0].mxu0
  %v430 = vadd.f32 0.0, %v429
  %v431 = vpop.f32.mrb[0].mxu0
  %432 = vmatprep.mubr.f32.mxu0 0.0
  %433 = vmatmul.mubr.f32.gmra.mrb[0].mxu0 %v167
  %v434 = vpop.f32.mrb[0].mxu0
  %v435 = vadd.f32 0.0, %v434
  %v436 = vpop.f32.mrb[0].mxu0
  %437 = vmatprep.mubr.f32.mxu0 0.0
  %438 = vmatmul.mubr.f32.gmra.mrb[0].mxu0 %v170
  %v439 = vpop.f32.mrb[0].mxu0
  %v440 = vadd.f32 0.0, %v439
  %v441 = vpop.f32.mrb[0].mxu0
  %442 = vmatprep.mubr.f32.mxu0 0.0
  %443 = vmatmul.mubr.f32.gmra.mrb[0].mxu0 %v173
  %v444 = vpop.f32.mrb[0].mxu0
  %v445 = vadd.f32 0.0, %v444
  %v446 = vpop.f32.mrb[0].mxu0
  %447 = vdwg.mxu0
  %v448 = vlaneseq
  %v449 = vshrl.u32 %v448, 7
  %v450 = vadd.s32 %v449, 8
  %v451 = vadd.s32 %v449, 16
  %v452 = vadd.s32 %v449, 24
  %v453 = vadd.s32 %v449, 32
  %v454 = vadd.s32 %v449, 40
  %v455 = vadd.s32 %v449, 48
  %v456 = vadd.s32 %v449, 56
  %v457 = vadd.s32 %v449, 64
  %v458 = vadd.s32 %v449, 72
  %v459 = vadd.s32 %v449, 80
  %v460 = vadd.s32 %v449, 88
  %v461 = vadd.s32 %v449, 96
  %v462 = vadd.s32 %v449, 104
  %v463 = vadd.s32 %v449, 112
  %v464 = vadd.s32 %v449, 120
  %v465 = vadd.s32 %v449, 128
  %v466 = vadd.s32 %v449, 136
  %v467 = vadd.s32 %v449, 144
  %v468 = vadd.s32 %v449, 152
  %v469 = vadd.s32 %v449, 160
  %v470 = vadd.s32 %v449, 168
  %v471 = vadd.s32 %v449, 176
  %v472 = vadd.s32 %v449, 184
  %v473 = vadd.s32 %v449, 192
  %v474 = vadd.s32 %v449, 200
  %v475 = vadd.s32 %v449, 208
  %v476 = vadd.s32 %v449, 216
  %v477 = vadd.s32 %v449, 224
  %v478 = vadd.s32 %v449, 232
  %v479 = vadd.s32 %v449, 240
  %v480 = vadd.s32 %v449, 248
  %v481 = vlaneseq
  %v482 = vand.u32 %v481, 127
  %v483 = vshra.s32 %v449, 6
  %v484 = vshra.s32 %v450, 6
  %v485 = vshra.s32 %v451, 6
  %v486 = vshra.s32 %v452, 6
  %v487 = vshra.s32 %v453, 6
  %v488 = vshra.s32 %v454, 6
  %v489 = vshra.s32 %v455, 6
  %v490 = vshra.s32 %v456, 6
  %v491 = vshra.s32 %v457, 6
  %v492 = vshra.s32 %v458, 6
  %v493 = vshra.s32 %v459, 6
  %v494 = vshra.s32 %v460, 6
  %v495 = vshra.s32 %v461, 6
  %v496 = vshra.s32 %v462, 6
  %v497 = vshra.s32 %v463, 6
  %v498 = vshra.s32 %v464, 6
  %v499 = vshra.s32 %v465, 6
  %v500 = vshra.s32 %v466, 6
  %v501 = vshra.s32 %v467, 6
  %v502 = vshra.s32 %v468, 6
  %v503 = vshra.s32 %v469, 6
  %v504 = vshra.s32 %v470, 6
  %v505 = vshra.s32 %v471, 6
  %v506 = vshra.s32 %v472, 6
  %v507 = vshra.s32 %v473, 6
  %v508 = vshra.s32 %v474, 6
  %v509 = vshra.s32 %v475, 6
  %v510 = vshra.s32 %v476, 6
  %v511 = vshra.s32 %v477, 6
  %v512 = vshra.s32 %v478, 6
  %v513 = vshra.s32 %v479, 6
  %v514 = vshra.s32 %v480, 6
  %v515 = vshra.s32 %v482, 5
  %vm516 = vcmp.eq.s32.totalorder %v483, %v515
  %vm517 = vcmp.eq.s32.totalorder %v484, %v515
  %vm518 = vcmp.eq.s32.totalorder %v485, %v515
  %vm519 = vcmp.eq.s32.totalorder %v486, %v515
  %vm520 = vcmp.eq.s32.totalorder %v487, %v515
  %vm521 = vcmp.eq.s32.totalorder %v488, %v515
  %vm522 = vcmp.eq.s32.totalorder %v489, %v515
  %vm523 = vcmp.eq.s32.totalorder %v490, %v515
  %vm524 = vcmp.eq.s32.totalorder %v491, %v515
  %vm525 = vcmp.eq.s32.totalorder %v492, %v515
  %vm526 = vcmp.eq.s32.totalorder %v493, %v515
  %vm527 = vcmp.eq.s32.totalorder %v494, %v515
  %vm528 = vcmp.eq.s32.totalorder %v495, %v515
  %vm529 = vcmp.eq.s32.totalorder %v496, %v515
  %vm530 = vcmp.eq.s32.totalorder %v497, %v515
  %vm531 = vcmp.eq.s32.totalorder %v498, %v515
  %vm532 = vcmp.eq.s32.totalorder %v499, %v515
  %vm533 = vcmp.eq.s32.totalorder %v500, %v515
  %vm534 = vcmp.eq.s32.totalorder %v501, %v515
  %vm535 = vcmp.eq.s32.totalorder %v502, %v515
  %vm536 = vcmp.eq.s32.totalorder %v503, %v515
  %vm537 = vcmp.eq.s32.totalorder %v504, %v515
  %vm538 = vcmp.eq.s32.totalorder %v505, %v515
  %vm539 = vcmp.eq.s32.totalorder %v506, %v515
  %vm540 = vcmp.eq.s32.totalorder %v507, %v515
  %vm541 = vcmp.eq.s32.totalorder %v508, %v515
  %vm542 = vcmp.eq.s32.totalorder %v509, %v515
  %vm543 = vcmp.eq.s32.totalorder %v510, %v515
  %vm544 = vcmp.eq.s32.totalorder %v511, %v515
  %vm545 = vcmp.eq.s32.totalorder %v512, %v515
  %vm546 = vcmp.eq.s32.totalorder %v513, %v515
  %vm547 = vcmp.eq.s32.totalorder %v514, %v515
  %v548 = vand.u32 %v482, 31
  %v549 = vand.u32 %v449, 31
  %v550 = vand.u32 %v450, 31
  %v551 = vand.u32 %v451, 31
  %v552 = vand.u32 %v452, 31
  %v553 = vand.u32 %v453, 31
  %v554 = vand.u32 %v454, 31
  %v555 = vand.u32 %v455, 31
  %v556 = vand.u32 %v456, 31
  %v557 = vand.u32 %v457, 31
  %v558 = vand.u32 %v458, 31
  %v559 = vand.u32 %v459, 31
  %v560 = vand.u32 %v460, 31
  %v561 = vand.u32 %v461, 31
  %v562 = vand.u32 %v462, 31
  %v563 = vand.u32 %v463, 31
  %v564 = vand.u32 %v464, 31
  %v565 = vand.u32 %v465, 31
  %v566 = vand.u32 %v466, 31
  %v567 = vand.u32 %v467, 31
  %v568 = vand.u32 %v468, 31
  %v569 = vand.u32 %v469, 31
  %v570 = vand.u32 %v470, 31
  %v571 = vand.u32 %v471, 31
  %v572 = vand.u32 %v472, 31
  %v573 = vand.u32 %v473, 31
  %v574 = vand.u32 %v474, 31
  %v575 = vand.u32 %v475, 31
  %v576 = vand.u32 %v476, 31
  %v577 = vand.u32 %v477, 31
  %v578 = vand.u32 %v478, 31
  %v579 = vand.u32 %v479, 31
  %v580 = vand.u32 %v480, 31
  %vm581 = vcmp.le.s32.totalorder %v548, %v549
  %vm582 = vcmp.le.s32.totalorder %v548, %v550
  %vm583 = vcmp.le.s32.totalorder %v548, %v551
  %vm584 = vcmp.le.s32.totalorder %v548, %v552
  %vm585 = vcmp.le.s32.totalorder %v548, %v553
  %vm586 = vcmp.le.s32.totalorder %v548, %v554
  %vm587 = vcmp.le.s32.totalorder %v548, %v555
  %vm588 = vcmp.le.s32.totalorder %v548, %v556
  %vm589 = vcmp.le.s32.totalorder %v548, %v557
  %vm590 = vcmp.le.s32.totalorder %v548, %v558
  %vm591 = vcmp.le.s32.totalorder %v548, %v559
  %vm592 = vcmp.le.s32.totalorder %v548, %v560
  %vm593 = vcmp.le.s32.totalorder %v548, %v561
  %vm594 = vcmp.le.s32.totalorder %v548, %v562
  %vm595 = vcmp.le.s32.totalorder %v548, %v563
  %vm596 = vcmp.le.s32.totalorder %v548, %v564
  %vm597 = vcmp.le.s32.totalorder %v548, %v565
  %vm598 = vcmp.le.s32.totalorder %v548, %v566
  %vm599 = vcmp.le.s32.totalorder %v548, %v567
  %vm600 = vcmp.le.s32.totalorder %v548, %v568
  %vm601 = vcmp.le.s32.totalorder %v548, %v569
  %vm602 = vcmp.le.s32.totalorder %v548, %v570
  %vm603 = vcmp.le.s32.totalorder %v548, %v571
  %vm604 = vcmp.le.s32.totalorder %v548, %v572
  %vm605 = vcmp.le.s32.totalorder %v548, %v573
  %vm606 = vcmp.le.s32.totalorder %v548, %v574
  %vm607 = vcmp.le.s32.totalorder %v548, %v575
  %vm608 = vcmp.le.s32.totalorder %v548, %v576
  %vm609 = vcmp.le.s32.totalorder %v548, %v577
  %vm610 = vcmp.le.s32.totalorder %v548, %v578
  %vm611 = vcmp.le.s32.totalorder %v548, %v579
  %vm612 = vcmp.le.s32.totalorder %v548, %v580
  %vm613 = vmand %vm516, %vm581
  %vm614 = vmand %vm517, %vm582
  %vm615 = vmand %vm518, %vm583
  %vm616 = vmand %vm519, %vm584
  %vm617 = vmand %vm520, %vm585
  %vm618 = vmand %vm521, %vm586
  %vm619 = vmand %vm522, %vm587
  %vm620 = vmand %vm523, %vm588
  %vm621 = vmand %vm524, %vm589
  %vm622 = vmand %vm525, %vm590
  %vm623 = vmand %vm526, %vm591
  %vm624 = vmand %vm527, %vm592
  %vm625 = vmand %vm528, %vm593
  %vm626 = vmand %vm529, %vm594
  %vm627 = vmand %vm530, %vm595
  %vm628 = vmand %vm531, %vm596
  %vm629 = vmand %vm532, %vm597
  %vm630 = vmand %vm533, %vm598
  %vm631 = vmand %vm534, %vm599
  %vm632 = vmand %vm535, %vm600
  %vm633 = vmand %vm536, %vm601
  %vm634 = vmand %vm537, %vm602
  %vm635 = vmand %vm538, %vm603
  %vm636 = vmand %vm539, %vm604
  %vm637 = vmand %vm540, %vm605
  %vm638 = vmand %vm541, %vm606
  %vm639 = vmand %vm542, %vm607
  %vm640 = vmand %vm543, %vm608
  %vm641 = vmand %vm544, %vm609
  %vm642 = vmand %vm545, %vm610
  %vm643 = vmand %vm546, %vm611
  %vm644 = vmand %vm547, %vm612
  %v645 = vsel %vm613, 0.0, -inf
  %v646 = vsel %vm614, 0.0, -inf
  %v647 = vsel %vm615, 0.0, -inf
  %v648 = vsel %vm616, 0.0, -inf
  %v649 = vsel %vm617, 0.0, -inf
  %v650 = vsel %vm618, 0.0, -inf
  %v651 = vsel %vm619, 0.0, -inf
  %v652 = vsel %vm620, 0.0, -inf
  %v653 = vsel %vm621, 0.0, -inf
  %v654 = vsel %vm622, 0.0, -inf
  %v655 = vsel %vm623, 0.0, -inf
  %v656 = vsel %vm624, 0.0, -inf
  %v657 = vsel %vm625, 0.0, -inf
  %v658 = vsel %vm626, 0.0, -inf
  %v659 = vsel %vm627, 0.0, -inf
  %v660 = vsel %vm628, 0.0, -inf
  %v661 = vsel %vm629, 0.0, -inf
  %v662 = vsel %vm630, 0.0, -inf
  %v663 = vsel %vm631, 0.0, -inf
  %v664 = vsel %vm632, 0.0, -inf
  %v665 = vsel %vm633, 0.0, -inf
  %v666 = vsel %vm634, 0.0, -inf
  %v667 = vsel %vm635, 0.0, -inf
  %v668 = vsel %vm636, 0.0, -inf
  %v669 = vsel %vm637, 0.0, -inf
  %v670 = vsel %vm638, 0.0, -inf
  %v671 = vsel %vm639, 0.0, -inf
  %v672 = vsel %vm640, 0.0, -inf
  %v673 = vsel %vm641, 0.0, -inf
  %v674 = vsel %vm642, 0.0, -inf
  %v675 = vsel %vm643, 0.0, -inf
  %v676 = vsel %vm644, 0.0, -inf
  %v677 = vmul.f32 %v290, 0.125
  %v678 = vmul.f32 %v295, 0.125
  %v679 = vmul.f32 %v300, 0.125
  %v680 = vmul.f32 %v305, 0.125
  %v681 = vmul.f32 %v310, 0.125
  %v682 = vmul.f32 %v315, 0.125
  %v683 = vmul.f32 %v320, 0.125
  %v684 = vmul.f32 %v325, 0.125
  %v685 = vmul.f32 %v330, 0.125
  %v686 = vmul.f32 %v335, 0.125
  %v687 = vmul.f32 %v340, 0.125
  %v688 = vmul.f32 %v345, 0.125
  %v689 = vmul.f32 %v350, 0.125
  %v690 = vmul.f32 %v355, 0.125
  %v691 = vmul.f32 %v360, 0.125
  %v692 = vmul.f32 %v365, 0.125
  %v693 = vmul.f32 %v370, 0.125
  %v694 = vmul.f32 %v375, 0.125
  %v695 = vmul.f32 %v380, 0.125
  %v696 = vmul.f32 %v385, 0.125
  %v697 = vmul.f32 %v390, 0.125
  %v698 = vmul.f32 %v395, 0.125
  %v699 = vmul.f32 %v400, 0.125
  %v700 = vmul.f32 %v405, 0.125
  %v701 = vmul.f32 %v410, 0.125
  %v702 = vmul.f32 %v415, 0.125
  %v703 = vmul.f32 %v420, 0.125
  %v704 = vmul.f32 %v425, 0.125
  %v705 = vmul.f32 %v430, 0.125
  %v706 = vmul.f32 %v435, 0.125
  %v707 = vmul.f32 %v440, 0.125
  %v708 = vmul.f32 %v445, 0.125
  %v709 = vadd.f32 %v677, %v645
  %v710 = vadd.f32 %v678, %v646
  %v711 = vadd.f32 %v679, %v647
  %v712 = vadd.f32 %v680, %v648
  %v713 = vadd.f32 %v681, %v649
  %v714 = vadd.f32 %v682, %v650
  %v715 = vadd.f32 %v683, %v651
  %v716 = vadd.f32 %v684, %v652
  %v717 = vadd.f32 %v685, %v653
  %v718 = vadd.f32 %v686, %v654
  %v719 = vadd.f32 %v687, %v655
  %v720 = vadd.f32 %v688, %v656
  %v721 = vadd.f32 %v689, %v657
  %v722 = vadd.f32 %v690, %v658
  %v723 = vadd.f32 %v691, %v659
  %v724 = vadd.f32 %v692, %v660
  %v725 = vadd.f32 %v693, %v661
  %v726 = vadd.f32 %v694, %v662
  %v727 = vadd.f32 %v695, %v663
  %v728 = vadd.f32 %v696, %v664
  %v729 = vadd.f32 %v697, %v665
  %v730 = vadd.f32 %v698, %v666
  %v731 = vadd.f32 %v699, %v667
  %v732 = vadd.f32 %v700, %v668
  %v733 = vadd.f32 %v701, %v669
  %v734 = vadd.f32 %v702, %v670
  %v735 = vadd.f32 %v703, %v671
  %v736 = vadd.f32 %v704, %v672
  %v737 = vadd.f32 %v705, %v673
  %v738 = vadd.f32 %v706, %v674
  %v739 = vadd.f32 %v707, %v675
  %v740 = vadd.f32 %v708, %v676
  %741 = vmax.xlane.f32.xlu0 %v709
  %v742 = vpop.xlane.xlu0 %741
  %743 = vmax.xlane.f32.xlu0 %v710
  %v744 = vpop.xlane.xlu0 %743
  %745 = vmax.xlane.f32.xlu0 %v711
  %v746 = vpop.xlane.xlu0 %745
  %747 = vmax.xlane.f32.xlu0 %v712
  %v748 = vpop.xlane.xlu0 %747
  %749 = vmax.xlane.f32.xlu0 %v713
  %v750 = vpop.xlane.xlu0 %749
  %751 = vmax.xlane.f32.xlu0 %v714
  %v752 = vpop.xlane.xlu0 %751
  %753 = vmax.xlane.f32.xlu0 %v715
  %v754 = vpop.xlane.xlu0 %753
  %755 = vmax.xlane.f32.xlu0 %v716
  %v756 = vpop.xlane.xlu0 %755
  %757 = vmax.xlane.f32.xlu0 %v717
  %v758 = vpop.xlane.xlu0 %757
  %759 = vmax.xlane.f32.xlu0 %v718
  %v760 = vpop.xlane.xlu0 %759
  %761 = vmax.xlane.f32.xlu0 %v719
  %v762 = vpop.xlane.xlu0 %761
  %763 = vmax.xlane.f32.xlu0 %v720
  %v764 = vpop.xlane.xlu0 %763
  %765 = vmax.xlane.f32.xlu0 %v721
  %v766 = vpop.xlane.xlu0 %765
  %767 = vmax.xlane.f32.xlu0 %v722
  %v768 = vpop.xlane.xlu0 %767
  %769 = vmax.xlane.f32.xlu0 %v723
  %v770 = vpop.xlane.xlu0 %769
  %771 = vmax.xlane.f32.xlu0 %v724
  %v772 = vpop.xlane.xlu0 %771
  %773 = vmax.xlane.f32.xlu0 %v725
  %v774 = vpop.xlane.xlu0 %773
  %775 = vmax.xlane.f32.xlu0 %v726
  %v776 = vpop.xlane.xlu0 %775
  %777 = vmax.xlane.f32.xlu0 %v727
  %v778 = vpop.xlane.xlu0 %777
  %779 = vmax.xlane.f32.xlu0 %v728
  %v780 = vpop.xlane.xlu0 %779
  %781 = vmax.xlane.f32.xlu0 %v729
  %v782 = vpop.xlane.xlu0 %781
  %783 = vmax.xlane.f32.xlu0 %v730
  %v784 = vpop.xlane.xlu0 %783
  %785 = vmax.xlane.f32.xlu0 %v731
  %v786 = vpop.xlane.xlu0 %785
  %787 = vmax.xlane.f32.xlu0 %v732
  %v788 = vpop.xlane.xlu0 %787
  %789 = vmax.xlane.f32.xlu0 %v733
  %v790 = vpop.xlane.xlu0 %789
  %791 = vmax.xlane.f32.xlu0 %v734
  %v792 = vpop.xlane.xlu0 %791
  %793 = vmax.xlane.f32.xlu0 %v735
  %v794 = vpop.xlane.xlu0 %793
  %795 = vmax.xlane.f32.xlu0 %v736
  %v796 = vpop.xlane.xlu0 %795
  %797 = vmax.xlane.f32.xlu0 %v737
  %v798 = vpop.xlane.xlu0 %797
  %799 = vmax.xlane.f32.xlu0 %v738
  %v800 = vpop.xlane.xlu0 %799
  %801 = vmax.xlane.f32.xlu0 %v739
  %v802 = vpop.xlane.xlu0 %801
  %803 = vmax.xlane.f32.xlu0 %v740
  %v804 = vpop.xlane.xlu0 %803
  %v805 = vsub.f32 %v709, %v742
  %v806 = vsub.f32 %v710, %v744
  %v807 = vsub.f32 %v711, %v746
  %v808 = vsub.f32 %v712, %v748
  %v809 = vsub.f32 %v713, %v750
  %v810 = vsub.f32 %v714, %v752
  %v811 = vsub.f32 %v715, %v754
  %v812 = vsub.f32 %v716, %v756
  %v813 = vsub.f32 %v717, %v758
  %v814 = vsub.f32 %v718, %v760
  %v815 = vsub.f32 %v719, %v762
  %v816 = vsub.f32 %v720, %v764
  %v817 = vsub.f32 %v721, %v766
  %v818 = vsub.f32 %v722, %v768
  %v819 = vsub.f32 %v723, %v770
  %v820 = vsub.f32 %v724, %v772
  %v821 = vsub.f32 %v725, %v774
  %v822 = vsub.f32 %v726, %v776
  %v823 = vsub.f32 %v727, %v778
  %v824 = vsub.f32 %v728, %v780
  %v825 = vsub.f32 %v729, %v782
  %v826 = vsub.f32 %v730, %v784
  %v827 = vsub.f32 %v731, %v786
  %v828 = vsub.f32 %v732, %v788
  %v829 = vsub.f32 %v733, %v790
  %v830 = vsub.f32 %v734, %v792
  %v831 = vsub.f32 %v735, %v794
  %v832 = vsub.f32 %v736, %v796
  %v833 = vsub.f32 %v737, %v798
  %v834 = vsub.f32 %v738, %v800
  %v835 = vsub.f32 %v739, %v802
  %v836 = vsub.f32 %v740, %v804
  %v837 = vmul.f32 %v805, 1.442695
  %v838 = vpow.pop %v837
  %v839 = vmul.f32 %v806, 1.442695
  %v840 = vpow.pop %v839
  %v841 = vmul.f32 %v807, 1.442695
  %v842 = vpow.pop %v841
  %v843 = vmul.f32 %v808, 1.442695
  %v844 = vpow.pop %v843
  %v845 = vmul.f32 %v809, 1.442695
  %v846 = vpow.pop %v845
  %v847 = vmul.f32 %v810, 1.442695
  %v848 = vpow.pop %v847
  %v849 = vmul.f32 %v811, 1.442695
  %v850 = vpow.pop %v849
  %v851 = vmul.f32 %v812, 1.442695
  %v852 = vpow.pop %v851
  %v853 = vmul.f32 %v813, 1.442695
  %v854 = vpow.pop %v853
  %v855 = vmul.f32 %v814, 1.442695
  %v856 = vpow.pop %v855
  %v857 = vmul.f32 %v815, 1.442695
  %v858 = vpow.pop %v857
  %v859 = vmul.f32 %v816, 1.442695
  %v860 = vpow.pop %v859
  %v861 = vmul.f32 %v817, 1.442695
  %v862 = vpow.pop %v861
  %v863 = vmul.f32 %v818, 1.442695
  %v864 = vpow.pop %v863
  %v865 = vmul.f32 %v819, 1.442695
  %v866 = vpow.pop %v865
  %v867 = vmul.f32 %v820, 1.442695
  %v868 = vpow.pop %v867
  %v869 = vmul.f32 %v821, 1.442695
  %v870 = vpow.pop %v869
  %v871 = vmul.f32 %v822, 1.442695
  %v872 = vpow.pop %v871
  %v873 = vmul.f32 %v823, 1.442695
  %v874 = vpow.pop %v873
  %v875 = vmul.f32 %v824, 1.442695
  %v876 = vpow.pop %v875
  %v877 = vmul.f32 %v825, 1.442695
  %v878 = vpow.pop %v877
  %v879 = vmul.f32 %v826, 1.442695
  %v880 = vpow.pop %v879
  %v881 = vmul.f32 %v827, 1.442695
  %v882 = vpow.pop %v881
  %v883 = vmul.f32 %v828, 1.442695
  %v884 = vpow.pop %v883
  %v885 = vmul.f32 %v829, 1.442695
  %v886 = vpow.pop %v885
  %v887 = vmul.f32 %v830, 1.442695
  %v888 = vpow.pop %v887
  %v889 = vmul.f32 %v831, 1.442695
  %v890 = vpow.pop %v889
  %v891 = vmul.f32 %v832, 1.442695
  %v892 = vpow.pop %v891
  %v893 = vmul.f32 %v833, 1.442695
  %v894 = vpow.pop %v893
  %v895 = vmul.f32 %v834, 1.442695
  %v896 = vpow.pop %v895
  %v897 = vmul.f32 %v835, 1.442695
  %v898 = vpow.pop %v897
  %v899 = vmul.f32 %v836, 1.442695
  %v900 = vpow.pop %v899
  %901 = vmatprep.subr.mxu0 0.0
  %902 = vmatpush1.msra.mxu0 %v62
  %903 = vmatprep.subr.mxu0 0.0
  %904 = vmatpush1.msra.mxu0 %v63
  %905 = vmatprep.subr.mxu0 0.0
  %906 = vmatpush1.msra.mxu0 %v64
  %907 = vmatprep.subr.mxu0 0.0
  %908 = vmatpush1.msra.mxu0 %v65
  %909 = vmatprep.subr.mxu0 0.0
  %910 = vmatpush1.msra.mxu0 %v66
  %911 = vmatprep.subr.mxu0 0.0
  %912 = vmatpush1.msra.mxu0 %v67
  %913 = vmatprep.subr.mxu0 0.0
  %914 = vmatpush1.msra.mxu0 %v68
  %915 = vmatprep.subr.mxu0 0.0
  %916 = vmatpush1.msra.mxu0 %v69
  %917 = vmatprep.subr.mxu0 0.0
  %918 = vmatpush1.msra.mxu0 %v70
  %919 = vmatprep.subr.mxu0 0.0
  %920 = vmatpush1.msra.mxu0 %v71
  %921 = vmatprep.subr.mxu0 0.0
  %922 = vmatpush1.msra.mxu0 %v72
  %923 = vmatprep.subr.mxu0 0.0
  %924 = vmatpush1.msra.mxu0 %v73
  %925 = vmatprep.subr.mxu0 0.0
  %926 = vmatpush1.msra.mxu0 %v74
  %927 = vmatprep.subr.mxu0 0.0
  %928 = vmatpush1.msra.mxu0 %v75
  %929 = vmatprep.subr.mxu0 0.0
  %930 = vmatpush1.msra.mxu0 %v76
  %931 = vmatprep.subr.mxu0 0.0
  %932 = vmatpush1.msra.mxu0 %v77
  %933 = vmatprep.subr.mxu0 0.0
  %934 = vmatpush1.msra.mxu0 0.0
  %935 = vmatprep.subr.mxu0 0.0
  %936 = vmatpush1.msra.mxu0 0.0
  %937 = vmatprep.subr.mxu0 0.0
  %938 = vmatpush1.msra.mxu0 0.0
  %939 = vmatprep.subr.mxu0 0.0
  %940 = vmatpush1.msra.mxu0 0.0
  %941 = vmatprep.subr.mxu0 0.0
  %942 = vmatpush1.msra.mxu0 0.0
  %943 = vmatprep.subr.mxu0 0.0
  %944 = vmatpush1.msra.mxu0 0.0
  %945 = vmatprep.subr.mxu0 0.0
  %946 = vmatpush1.msra.mxu0 0.0
  %947 = vmatprep.subr.mxu0 0.0
  %948 = vmatpush1.msra.mxu0 0.0
  %949 = vmatprep.subr.mxu0 0.0
  %950 = vmatpush1.msra.mxu0 0.0
  %951 = vmatprep.subr.mxu0 0.0
  %952 = vmatpush1.msra.mxu0 0.0
  %953 = vmatprep.subr.mxu0 0.0
  %954 = vmatpush1.msra.mxu0 0.0
  %955 = vmatprep.subr.mxu0 0.0
  %956 = vmatpush1.msra.mxu0 0.0
  %957 = vmatprep.subr.mxu0 0.0
  %958 = vmatpush1.msra.mxu0 0.0
  %959 = vmatprep.subr.mxu0 0.0
  %960 = vmatpush1.msra.mxu0 0.0
  %961 = vmatprep.subr.mxu0 0.0
  %962 = vmatpush1.msra.mxu0 0.0
  %963 = vmatprep.subr.mxu0 0.0
  %964 = vmatpush1.msra.mxu0 0.0
  %965 = vmatprep.mubr.f32.mxu0 0.0
  %966 = vmatmul.mubr.f32.gmra.mrb[0].mxu0 %v838
  %v967 = vpop.f32.mrb[0].mxu0
  %v968 = vadd.f32 0.0, %v967
  %v969 = vpop.f32.mrb[0].mxu0
  %970 = vmatprep.mubr.f32.mxu0 0.0
  %971 = vmatmul.mubr.f32.gmra.mrb[0].mxu0 %v840
  %v972 = vpop.f32.mrb[0].mxu0
  %v973 = vadd.f32 0.0, %v972
  %v974 = vpop.f32.mrb[0].mxu0
  %975 = vmatprep.mubr.f32.mxu0 0.0
  %976 = vmatmul.mubr.f32.gmra.mrb[0].mxu0 %v842
  %v977 = vpop.f32.mrb[0].mxu0
  %v978 = vadd.f32 0.0, %v977
  %v979 = vpop.f32.mrb[0].mxu0
  %980 = vmatprep.mubr.f32.mxu0 0.0
  %981 = vmatmul.mubr.f32.gmra.mrb[0].mxu0 %v844
  %v982 = vpop.f32.mrb[0].mxu0
  %v983 = vadd.f32 0.0, %v982
  %v984 = vpop.f32.mrb[0].mxu0
  %985 = vmatprep.mubr.f32.mxu0 0.0
  %986 = vmatmul.mubr.f32.gmra.mrb[0].mxu0 %v846
  %v987 = vpop.f32.mrb[0].mxu0
  %v988 = vadd.f32 0.0, %v987
  %v989 = vpop.f32.mrb[0].mxu0
  %990 = vmatprep.mubr.f32.mxu0 0.0
  %991 = vmatmul.mubr.f32.gmra.mrb[0].mxu0 %v848
  %v992 = vpop.f32.mrb[0].mxu0
  %v993 = vadd.f32 0.0, %v992
  %v994 = vpop.f32.mrb[0].mxu0
  %995 = vmatprep.mubr.f32.mxu0 0.0
  %996 = vmatmul.mubr.f32.gmra.mrb[0].mxu0 %v850
  %v997 = vpop.f32.mrb[0].mxu0
  %v998 = vadd.f32 0.0, %v997
  %v999 = vpop.f32.mrb[0].mxu0
  %1000 = vmatprep.mubr.f32.mxu0 0.0
  %1001 = vmatmul.mubr.f32.gmra.mrb[0].mxu0 %v852
  %v1002 = vpop.f32.mrb[0].mxu0
  %v1003 = vadd.f32 0.0, %v1002
  %v1004 = vpop.f32.mrb[0].mxu0
  %1005 = vmatprep.mubr.f32.mxu0 0.0
  %1006 = vmatmul.mubr.f32.gmra.mrb[0].mxu0 %v854
  %v1007 = vpop.f32.mrb[0].mxu0
  %v1008 = vadd.f32 0.0, %v1007
  %v1009 = vpop.f32.mrb[0].mxu0
  %1010 = vmatprep.mubr.f32.mxu0 0.0
  %1011 = vmatmul.mubr.f32.gmra.mrb[0].mxu0 %v856
  %v1012 = vpop.f32.mrb[0].mxu0
  %v1013 = vadd.f32 0.0, %v1012
  %v1014 = vpop.f32.mrb[0].mxu0
  %1015 = vmatprep.mubr.f32.mxu0 0.0
  %1016 = vmatmul.mubr.f32.gmra.mrb[0].mxu0 %v858
  %v1017 = vpop.f32.mrb[0].mxu0
  %v1018 = vadd.f32 0.0, %v1017
  %v1019 = vpop.f32.mrb[0].mxu0
  %1020 = vmatprep.mubr.f32.mxu0 0.0
  %1021 = vmatmul.mubr.f32.gmra.mrb[0].mxu0 %v860
  %v1022 = vpop.f32.mrb[0].mxu0
  %v1023 = vadd.f32 0.0, %v1022
  %v1024 = vpop.f32.mrb[0].mxu0
  %1025 = vmatprep.mubr.f32.mxu0 0.0
  %1026 = vmatmul.mubr.f32.gmra.mrb[0].mxu0 %v862
  %v1027 = vpop.f32.mrb[0].mxu0
  %v1028 = vadd.f32 0.0, %v1027
  %v1029 = vpop.f32.mrb[0].mxu0
  %1030 = vmatprep.mubr.f32.mxu0 0.0
  %1031 = vmatmul.mubr.f32.gmra.mrb[0].mxu0 %v864
  %v1032 = vpop.f32.mrb[0].mxu0
  %v1033 = vadd.f32 0.0, %v1032
  %v1034 = vpop.f32.mrb[0].mxu0
  %1035 = vmatprep.mubr.f32.mxu0 0.0
  %1036 = vmatmul.mubr.f32.gmra.mrb[0].mxu0 %v866
  %v1037 = vpop.f32.mrb[0].mxu0
  %v1038 = vadd.f32 0.0, %v1037
  %v1039 = vpop.f32.mrb[0].mxu0
  %1040 = vmatprep.mubr.f32.mxu0 0.0
  %1041 = vmatmul.mubr.f32.gmra.mrb[0].mxu0 %v868
  %v1042 = vpop.f32.mrb[0].mxu0
  %v1043 = vadd.f32 0.0, %v1042
  %v1044 = vpop.f32.mrb[0].mxu0
  %1045 = vmatprep.mubr.f32.mxu0 0.0
  %1046 = vmatmul.mubr.f32.gmra.mrb[0].mxu0 %v870
  %v1047 = vpop.f32.mrb[0].mxu0
  %v1048 = vadd.f32 0.0, %v1047
  %v1049 = vpop.f32.mrb[0].mxu0
  %1050 = vmatprep.mubr.f32.mxu0 0.0
  %1051 = vmatmul.mubr.f32.gmra.mrb[0].mxu0 %v872
  %v1052 = vpop.f32.mrb[0].mxu0
  %v1053 = vadd.f32 0.0, %v1052
  %v1054 = vpop.f32.mrb[0].mxu0
  %1055 = vmatprep.mubr.f32.mxu0 0.0
  %1056 = vmatmul.mubr.f32.gmra.mrb[0].mxu0 %v874
  %v1057 = vpop.f32.mrb[0].mxu0
  %v1058 = vadd.f32 0.0, %v1057
  %v1059 = vpop.f32.mrb[0].mxu0
  %1060 = vmatprep.mubr.f32.mxu0 0.0
  %1061 = vmatmul.mubr.f32.gmra.mrb[0].mxu0 %v876
  %v1062 = vpop.f32.mrb[0].mxu0
  %v1063 = vadd.f32 0.0, %v1062
  %v1064 = vpop.f32.mrb[0].mxu0
  %1065 = vmatprep.mubr.f32.mxu0 0.0
  %1066 = vmatmul.mubr.f32.gmra.mrb[0].mxu0 %v878
  %v1067 = vpop.f32.mrb[0].mxu0
  %v1068 = vadd.f32 0.0, %v1067
  %v1069 = vpop.f32.mrb[0].mxu0
  %1070 = vmatprep.mubr.f32.mxu0 0.0
  %1071 = vmatmul.mubr.f32.gmra.mrb[0].mxu0 %v880
  %v1072 = vpop.f32.mrb[0].mxu0
  %v1073 = vadd.f32 0.0, %v1072
  %v1074 = vpop.f32.mrb[0].mxu0
  %1075 = vmatprep.mubr.f32.mxu0 0.0
  %1076 = vmatmul.mubr.f32.gmra.mrb[0].mxu0 %v882
  %v1077 = vpop.f32.mrb[0].mxu0
  %v1078 = vadd.f32 0.0, %v1077
  %v1079 = vpop.f32.mrb[0].mxu0
  %1080 = vmatprep.mubr.f32.mxu0 0.0
  %1081 = vmatmul.mubr.f32.gmra.mrb[0].mxu0 %v884
  %v1082 = vpop.f32.mrb[0].mxu0
  %v1083 = vadd.f32 0.0, %v1082
  %v1084 = vpop.f32.mrb[0].mxu0
  %1085 = vmatprep.mubr.f32.mxu0 0.0
  %1086 = vmatmul.mubr.f32.gmra.mrb[0].mxu0 %v886
  %v1087 = vpop.f32.mrb[0].mxu0
  %v1088 = vadd.f32 0.0, %v1087
  %v1089 = vpop.f32.mrb[0].mxu0
  %1090 = vmatprep.mubr.f32.mxu0 0.0
  %1091 = vmatmul.mubr.f32.gmra.mrb[0].mxu0 %v888
  %v1092 = vpop.f32.mrb[0].mxu0
  %v1093 = vadd.f32 0.0, %v1092
  %v1094 = vpop.f32.mrb[0].mxu0
  %1095 = vmatprep.mubr.f32.mxu0 0.0
  %1096 = vmatmul.mubr.f32.gmra.mrb[0].mxu0 %v890
  %v1097 = vpop.f32.mrb[0].mxu0
  %v1098 = vadd.f32 0.0, %v1097
  %v1099 = vpop.f32.mrb[0].mxu0
  %1100 = vmatprep.mubr.f32.mxu0 0.0
  %1101 = vmatmul.mubr.f32.gmra.mrb[0].mxu0 %v892
  %v1102 = vpop.f32.mrb[0].mxu0
  %v1103 = vadd.f32 0.0, %v1102
  %v1104 = vpop.f32.mrb[0].mxu0
  %1105 = vmatprep.mubr.f32.mxu0 0.0
  %1106 = vmatmul.mubr.f32.gmra.mrb[0].mxu0 %v894
  %v1107 = vpop.f32.mrb[0].mxu0
  %v1108 = vadd.f32 0.0, %v1107
  %v1109 = vpop.f32.mrb[0].mxu0
  %1110 = vmatprep.mubr.f32.mxu0 0.0
  %1111 = vmatmul.mubr.f32.gmra.mrb[0].mxu0 %v896
  %v1112 = vpop.f32.mrb[0].mxu0
  %v1113 = vadd.f32 0.0, %v1112
  %v1114 = vpop.f32.mrb[0].mxu0
  %1115 = vmatprep.mubr.f32.mxu0 0.0
  %1116 = vmatmul.mubr.f32.gmra.mrb[0].mxu0 %v898
  %v1117 = vpop.f32.mrb[0].mxu0
  %v1118 = vadd.f32 0.0, %v1117
  %v1119 = vpop.f32.mrb[0].mxu0
  %1120 = vmatprep.mubr.f32.mxu0 0.0
  %1121 = vmatmul.mubr.f32.gmra.mrb[0].mxu0 %v900
  %v1122 = vpop.f32.mrb[0].mxu0
  %v1123 = vadd.f32 0.0, %v1122
  %v1124 = vpop.f32.mrb[0].mxu0
  %1125 = vdwg.mxu0
  %1126 = vadd.xlane.f32.xlu0 %v838
  %v1127 = vpop.xlane.xlu0 %1126
  %1128 = vadd.xlane.f32.xlu0 %v840
  %v1129 = vpop.xlane.xlu0 %1128
  %1130 = vadd.xlane.f32.xlu0 %v842
  %v1131 = vpop.xlane.xlu0 %1130
  %1132 = vadd.xlane.f32.xlu0 %v844
  %v1133 = vpop.xlane.xlu0 %1132
  %1134 = vadd.xlane.f32.xlu0 %v846
  %v1135 = vpop.xlane.xlu0 %1134
  %1136 = vadd.xlane.f32.xlu0 %v848
  %v1137 = vpop.xlane.xlu0 %1136
  %1138 = vadd.xlane.f32.xlu0 %v850
  %v1139 = vpop.xlane.xlu0 %1138
  %1140 = vadd.xlane.f32.xlu0 %v852
  %v1141 = vpop.xlane.xlu0 %1140
  %1142 = vadd.xlane.f32.xlu0 %v854
  %v1143 = vpop.xlane.xlu0 %1142
  %1144 = vadd.xlane.f32.xlu0 %v856
  %v1145 = vpop.xlane.xlu0 %1144
  %1146 = vadd.xlane.f32.xlu0 %v858
  %v1147 = vpop.xlane.xlu0 %1146
  %1148 = vadd.xlane.f32.xlu0 %v860
  %v1149 = vpop.xlane.xlu0 %1148
  %1150 = vadd.xlane.f32.xlu0 %v862
  %v1151 = vpop.xlane.xlu0 %1150
  %1152 = vadd.xlane.f32.xlu0 %v864
  %v1153 = vpop.xlane.xlu0 %1152
  %1154 = vadd.xlane.f32.xlu0 %v866
  %v1155 = vpop.xlane.xlu0 %1154
  %1156 = vadd.xlane.f32.xlu0 %v868
  %v1157 = vpop.xlane.xlu0 %1156
  %1158 = vadd.xlane.f32.xlu0 %v870
  %v1159 = vpop.xlane.xlu0 %1158
  %1160 = vadd.xlane.f32.xlu0 %v872
  %v1161 = vpop.xlane.xlu0 %1160
  %1162 = vadd.xlane.f32.xlu0 %v874
  %v1163 = vpop.xlane.xlu0 %1162
  %1164 = vadd.xlane.f32.xlu0 %v876
  %v1165 = vpop.xlane.xlu0 %1164
  %1166 = vadd.xlane.f32.xlu0 %v878
  %v1167 = vpop.xlane.xlu0 %1166
  %1168 = vadd.xlane.f32.xlu0 %v880
  %v1169 = vpop.xlane.xlu0 %1168
  %1170 = vadd.xlane.f32.xlu0 %v882
  %v1171 = vpop.xlane.xlu0 %1170
  %1172 = vadd.xlane.f32.xlu0 %v884
  %v1173 = vpop.xlane.xlu0 %1172
  %1174 = vadd.xlane.f32.xlu0 %v886
  %v1175 = vpop.xlane.xlu0 %1174
  %1176 = vadd.xlane.f32.xlu0 %v888
  %v1177 = vpop.xlane.xlu0 %1176
  %1178 = vadd.xlane.f32.xlu0 %v890
  %v1179 = vpop.xlane.xlu0 %1178
  %1180 = vadd.xlane.f32.xlu0 %v892
  %v1181 = vpop.xlane.xlu0 %1180
  %1182 = vadd.xlane.f32.xlu0 %v894
  %v1183 = vpop.xlane.xlu0 %1182
  %1184 = vadd.xlane.f32.xlu0 %v896
  %v1185 = vpop.xlane.xlu0 %1184
  %1186 = vadd.xlane.f32.xlu0 %v898
  %v1187 = vpop.xlane.xlu0 %1186
  %1188 = vadd.xlane.f32.xlu0 %v900
  %v1189 = vpop.xlane.xlu0 %1188
  %v1190 = vrcp.pop %v1127
  %v1191 = vrcp.pop %v1129
  %v1192 = vrcp.pop %v1131
  %v1193 = vrcp.pop %v1133
  %v1194 = vrcp.pop %v1135
  %v1195 = vrcp.pop %v1137
  %v1196 = vrcp.pop %v1139
  %v1197 = vrcp.pop %v1141
  %v1198 = vrcp.pop %v1143
  %v1199 = vrcp.pop %v1145
  %v1200 = vrcp.pop %v1147
  %v1201 = vrcp.pop %v1149
  %v1202 = vrcp.pop %v1151
  %v1203 = vrcp.pop %v1153
  %v1204 = vrcp.pop %v1155
  %v1205 = vrcp.pop %v1157
  %v1206 = vrcp.pop %v1159
  %v1207 = vrcp.pop %v1161
  %v1208 = vrcp.pop %v1163
  %v1209 = vrcp.pop %v1165
  %v1210 = vrcp.pop %v1167
  %v1211 = vrcp.pop %v1169
  %v1212 = vrcp.pop %v1171
  %v1213 = vrcp.pop %v1173
  %v1214 = vrcp.pop %v1175
  %v1215 = vrcp.pop %v1177
  %v1216 = vrcp.pop %v1179
  %v1217 = vrcp.pop %v1181
  %v1218 = vrcp.pop %v1183
  %v1219 = vrcp.pop %v1185
  %v1220 = vrcp.pop %v1187
  %v1221 = vrcp.pop %v1189
  %v1222 = vmul.f32 %v1127, %v1190
  %v1223 = vmul.f32 %v1129, %v1191
  %v1224 = vmul.f32 %v1131, %v1192
  %v1225 = vmul.f32 %v1133, %v1193
  %v1226 = vmul.f32 %v1135, %v1194
  %v1227 = vmul.f32 %v1137, %v1195
  %v1228 = vmul.f32 %v1139, %v1196
  %v1229 = vmul.f32 %v1141, %v1197
  %v1230 = vmul.f32 %v1143, %v1198
  %v1231 = vmul.f32 %v1145, %v1199
  %v1232 = vmul.f32 %v1147, %v1200
  %v1233 = vmul.f32 %v1149, %v1201
  %v1234 = vmul.f32 %v1151, %v1202
  %v1235 = vmul.f32 %v1153, %v1203
  %v1236 = vmul.f32 %v1155, %v1204
  %v1237 = vmul.f32 %v1157, %v1205
  %v1238 = vmul.f32 %v1159, %v1206
  %v1239 = vmul.f32 %v1161, %v1207
  %v1240 = vmul.f32 %v1163, %v1208
  %v1241 = vmul.f32 %v1165, %v1209
  %v1242 = vmul.f32 %v1167, %v1210
  %v1243 = vmul.f32 %v1169, %v1211
  %v1244 = vmul.f32 %v1171, %v1212
  %v1245 = vmul.f32 %v1173, %v1213
  %v1246 = vmul.f32 %v1175, %v1214
  %v1247 = vmul.f32 %v1177, %v1215
  %v1248 = vmul.f32 %v1179, %v1216
  %v1249 = vmul.f32 %v1181, %v1217
  %v1250 = vmul.f32 %v1183, %v1218
  %v1251 = vmul.f32 %v1185, %v1219
  %v1252 = vmul.f32 %v1187, %v1220
  %v1253 = vmul.f32 %v1189, %v1221
  %v1254 = vsub.f32 2.0, %v1222
  %v1255 = vsub.f32 2.0, %v1223
  %v1256 = vsub.f32 2.0, %v1224
  %v1257 = vsub.f32 2.0, %v1225
  %v1258 = vsub.f32 2.0, %v1226
  %v1259 = vsub.f32 2.0, %v1227
  %v1260 = vsub.f32 2.0, %v1228
  %v1261 = vsub.f32 2.0, %v1229
  %v1262 = vsub.f32 2.0, %v1230
  %v1263 = vsub.f32 2.0, %v1231
  %v1264 = vsub.f32 2.0, %v1232
  %v1265 = vsub.f32 2.0, %v1233
  %v1266 = vsub.f32 2.0, %v1234
  %v1267 = vsub.f32 2.0, %v1235
  %v1268 = vsub.f32 2.0, %v1236
  %v1269 = vsub.f32 2.0, %v1237
  %v1270 = vsub.f32 2.0, %v1238
  %v1271 = vsub.f32 2.0, %v1239
  %v1272 = vsub.f32 2.0, %v1240
  %v1273 = vsub.f32 2.0, %v1241
  %v1274 = vsub.f32 2.0, %v1242
  %v1275 = vsub.f32 2.0, %v1243
  %v1276 = vsub.f32 2.0, %v1244
  %v1277 = vsub.f32 2.0, %v1245
  %v1278 = vsub.f32 2.0, %v1246
  %v1279 = vsub.f32 2.0, %v1247
  %v1280 = vsub.f32 2.0, %v1248
  %v1281 = vsub.f32 2.0, %v1249
  %v1282 = vsub.f32 2.0, %v1250
  %v1283 = vsub.f32 2.0, %v1251
  %v1284 = vsub.f32 2.0, %v1252
  %v1285 = vsub.f32 2.0, %v1253
  %v1286 = vmul.f32 %v1190, %v1254
  %v1287 = vmul.f32 %v1191, %v1255
  %v1288 = vmul.f32 %v1192, %v1256
  %v1289 = vmul.f32 %v1193, %v1257
  %v1290 = vmul.f32 %v1194, %v1258
  %v1291 = vmul.f32 %v1195, %v1259
  %v1292 = vmul.f32 %v1196, %v1260
  %v1293 = vmul.f32 %v1197, %v1261
  %v1294 = vmul.f32 %v1198, %v1262
  %v1295 = vmul.f32 %v1199, %v1263
  %v1296 = vmul.f32 %v1200, %v1264
  %v1297 = vmul.f32 %v1201, %v1265
  %v1298 = vmul.f32 %v1202, %v1266
  %v1299 = vmul.f32 %v1203, %v1267
  %v1300 = vmul.f32 %v1204, %v1268
  %v1301 = vmul.f32 %v1205, %v1269
  %v1302 = vmul.f32 %v1206, %v1270
  %v1303 = vmul.f32 %v1207, %v1271
  %v1304 = vmul.f32 %v1208, %v1272
  %v1305 = vmul.f32 %v1209, %v1273
  %v1306 = vmul.f32 %v1210, %v1274
  %v1307 = vmul.f32 %v1211, %v1275
  %v1308 = vmul.f32 %v1212, %v1276
  %v1309 = vmul.f32 %v1213, %v1277
  %v1310 = vmul.f32 %v1214, %v1278
  %v1311 = vmul.f32 %v1215, %v1279
  %v1312 = vmul.f32 %v1216, %v1280
  %v1313 = vmul.f32 %v1217, %v1281
  %v1314 = vmul.f32 %v1218, %v1282
  %v1315 = vmul.f32 %v1219, %v1283
  %v1316 = vmul.f32 %v1220, %v1284
  %v1317 = vmul.f32 %v1221, %v1285
  %v1318 = vmul.f32 %v968, %v1286
  %v1319 = vmul.f32 %v973, %v1287
  %v1320 = vmul.f32 %v978, %v1288
  %v1321 = vmul.f32 %v983, %v1289
  %v1322 = vmul.f32 %v988, %v1290
  %v1323 = vmul.f32 %v993, %v1291
  %v1324 = vmul.f32 %v998, %v1292
  %v1325 = vmul.f32 %v1003, %v1293
  %v1326 = vmul.f32 %v1008, %v1294
  %v1327 = vmul.f32 %v1013, %v1295
  %v1328 = vmul.f32 %v1018, %v1296
  %v1329 = vmul.f32 %v1023, %v1297
  %v1330 = vmul.f32 %v1028, %v1298
  %v1331 = vmul.f32 %v1033, %v1299
  %v1332 = vmul.f32 %v1038, %v1300
  %v1333 = vmul.f32 %v1043, %v1301
  %v1334 = vmul.f32 %v1048, %v1302
  %v1335 = vmul.f32 %v1053, %v1303
  %v1336 = vmul.f32 %v1058, %v1304
  %v1337 = vmul.f32 %v1063, %v1305
  %v1338 = vmul.f32 %v1068, %v1306
  %v1339 = vmul.f32 %v1073, %v1307
  %v1340 = vmul.f32 %v1078, %v1308
  %v1341 = vmul.f32 %v1083, %v1309
  %v1342 = vmul.f32 %v1088, %v1310
  %v1343 = vmul.f32 %v1093, %v1311
  %v1344 = vmul.f32 %v1098, %v1312
  %v1345 = vmul.f32 %v1103, %v1313
  %v1346 = vmul.f32 %v1108, %v1314
  %v1347 = vmul.f32 %v1113, %v1315
  %v1348 = vmul.f32 %v1118, %v1316
  %v1349 = vmul.f32 %v1123, %v1317
  %1350 = vst.msk [vmem:[%s3] sm:$0xff] %vm78, %v1318
  %1351 = vst.msk [vmem:[%s3 + $0x8] sm:$0xff] %vm78, %v1319
  %1352 = vst.msk [vmem:[%s3 + $0x10] sm:$0xff] %vm78, %v1320
  %1353 = vst.msk [vmem:[%s3 + $0x18] sm:$0xff] %vm78, %v1321
  %1354 = vst.msk [vmem:[%s3 + $0x20] sm:$0xff] %vm78, %v1322
  %1355 = vst.msk [vmem:[%s3 + $0x28] sm:$0xff] %vm78, %v1323
  %1356 = vst.msk [vmem:[%s3 + $0x30] sm:$0xff] %vm78, %v1324
  %1357 = vst.msk [vmem:[%s3 + $0x38] sm:$0xff] %vm78, %v1325
  %1358 = vst.msk [vmem:[%s3 + $0x40] sm:$0xff] %vm78, %v1326
  %1359 = vst.msk [vmem:[%s3 + $0x48] sm:$0xff] %vm78, %v1327
  %1360 = vst.msk [vmem:[%s3 + $0x50] sm:$0xff] %vm78, %v1328
  %1361 = vst.msk [vmem:[%s3 + $0x58] sm:$0xff] %vm78, %v1329
  %1362 = vst.msk [vmem:[%s3 + $0x60] sm:$0xff] %vm78, %v1330
  %1363 = vst.msk [vmem:[%s3 + $0x68] sm:$0xff] %vm78, %v1331
  %1364 = vst.msk [vmem:[%s3 + $0x70] sm:$0xff] %vm78, %v1332
  %1365 = vst.msk [vmem:[%s3 + $0x78] sm:$0xff] %vm78, %v1333
  %1366 = vst.msk [vmem:[%s3 + $0x80] sm:$0xff] %vm78, %v1334
  %1367 = vst.msk [vmem:[%s3 + $0x88] sm:$0xff] %vm78, %v1335
  %1368 = vst.msk [vmem:[%s3 + $0x90] sm:$0xff] %vm78, %v1336
  %1369 = vst.msk [vmem:[%s3 + $0x98] sm:$0xff] %vm78, %v1337
  %1370 = vst.msk [vmem:[%s3 + $0xa0] sm:$0xff] %vm78, %v1338
  %1371 = vst.msk [vmem:[%s3 + $0xa8] sm:$0xff] %vm78, %v1339
  %1372 = vst.msk [vmem:[%s3 + $0xb0] sm:$0xff] %vm78, %v1340
  %1373 = vst.msk [vmem:[%s3 + $0xb8] sm:$0xff] %vm78, %v1341
  %1374 = vst.msk [vmem:[%s3 + $0xc0] sm:$0xff] %vm78, %v1342
  %1375 = vst.msk [vmem:[%s3 + $0xc8] sm:$0xff] %vm78, %v1343
  %1376 = vst.msk [vmem:[%s3 + $0xd0] sm:$0xff] %vm78, %v1344
  %1377 = vst.msk [vmem:[%s3 + $0xd8] sm:$0xff] %vm78, %v1345
  %1378 = vst.msk [vmem:[%s3 + $0xe0] sm:$0xff] %vm78, %v1346
  %1379 = vst.msk [vmem:[%s3 + $0xe8] sm:$0xff] %vm78, %v1347
  %1380 = vst.msk [vmem:[%s3 + $0xf0] sm:$0xff] %vm78, %v1348
  %1381 = vst.msk [vmem:[%s3 + $0xf8] sm:$0xff] %vm78, %v1349
  // Predicated region
  $region14: #{tpu_custom_call.1} parent=0 // pred_check
    _
  $region15: #{tpu_custom_call.1} parent=0 // pred_check_branch
    %1383 = sbr.rel (0) target = $region17
  $region16: #{tpu_custom_call.1} parent=0 // pred_region
    _
  $region17: #{tpu_custom_call.1} parent=0 // pred_fallthru
    _
  // Predicated region
  $region18: #{tpu_custom_call.1} parent=0 // pred_check
    _
  $region19: #{tpu_custom_call.1} parent=0 // pred_check_branch
    %1385 = sbr.rel (0) target = $region21
  $region20: #{tpu_custom_call.1} parent=0 // pred_region
    _
  $region21: #{tpu_custom_call.1} parent=0 // pred_fallthru
    _

</llo_original>
